<compile_context>
chip_gen: v7x
topology: tpu7x:2x2x1
jax: 0.10.0
libtpu: 0.0.40
codegen_flags: <defaults>
</compile_context>

<pallas_src>
import math
from functools import partial

import jax
import jax.numpy as jnp
from jax import lax
from jax.experimental import pallas as pl
from jax.experimental.pallas import tpu as pltpu

_LN_EPS = 1e-5  # torch.nn.LayerNorm default


def _round_up(x, m):
    return (x + m - 1) // m * m


def _vmem_limit_bytes(*tile_elems):
    # f32 upper bound per element, double-buffered, + headroom; clamp to sane range.
    est = 2 * 4 * int(sum(tile_elems)) + (4 << 20)
    return int(min(max(est, 32 << 20), 100 << 20))


def _layer_norm_f32(x, gamma, beta):
    mu = jnp.mean(x, axis=-1, keepdims=True)
    xc = x - mu
    var = jnp.mean(xc * xc, axis=-1, keepdims=True)
    return xc * lax.rsqrt(var + _LN_EPS) * gamma + beta


def _gelu_erf(x):
    # exact GELU (matches torch.nn.GELU default)
    return 0.5 * x * (1.0 + lax.erf(x * (1.0 / math.sqrt(2.0))))


# ---------------------------------------------------------------------------
# Kernel A: LayerNorm(norm1) + QKV projection
# ---------------------------------------------------------------------------
def _ln_qkv_kernel(x_ref, g_ref, b_ref, w_ref, wb_ref, o_ref, *, compute_dtype):
    x = x_ref[...].astype(jnp.float32)
    xn = _layer_norm_f32(x, g_ref[...].astype(jnp.float32),
                         b_ref[...].astype(jnp.float32))
    qkv = jnp.dot(xn.astype(compute_dtype), w_ref[...],
                  preferred_element_type=jnp.float32)
    qkv = qkv + wb_ref[...].astype(jnp.float32)
    o_ref[...] = qkv.astype(o_ref.dtype)


# ---------------------------------------------------------------------------
# Kernel B: attention core for one (batch, head)
# ---------------------------------------------------------------------------
def _attention_kernel(q_ref, k_ref, v_ref, o_ref, a_ref, *, scale, compute_dtype):
    q = q_ref[0].astype(jnp.float32) * scale          # [N, hd]
    k = k_ref[0]
    # q @ k^T, f32 accumulation
    logits = lax.dot_general(q.astype(compute_dtype), k.astype(compute_dtype),
                             (((1,), (1,)), ((), ())),
                             preferred_element_type=jnp.float32)   # [N, N]
    a_ref[0] = logits.astype(a_ref.dtype)             # attn_wo_softmax
    m = jnp.max(logits, axis=-1, keepdims=True)
    p = jnp.exp(logits - m)
    attn = p / jnp.sum(p, axis=-1, keepdims=True)
    out = jnp.dot(attn.astype(compute_dtype), v_ref[0].astype(compute_dtype),
                  preferred_element_type=jnp.float32)  # [N, hd]
    o_ref[0] = out.astype(o_ref.dtype)


# ---------------------------------------------------------------------------
# Kernel C: attention proj + residual + LayerNorm(norm2) + MLP(GELU) + residual
# ---------------------------------------------------------------------------
def _proj_mlp_kernel(x_ref, ao_ref, pw_ref, pb_ref, g_ref, bt_ref,
                     w1_ref, b1_ref, w2_ref, b2_ref, o_ref, *, compute_dtype):
    x = x_ref[...].astype(jnp.float32)
    proj = jnp.dot(ao_ref[...].astype(compute_dtype), pw_ref[...],
                   preferred_element_type=jnp.float32)
    y = x + proj + pb_ref[...].astype(jnp.float32)     # residual 1
    yn = _layer_norm_f32(y, g_ref[...].astype(jnp.float32),
                         bt_ref[...].astype(jnp.float32))
    h = jnp.dot(yn.astype(compute_dtype), w1_ref[...],
                preferred_element_type=jnp.float32)
    h = _gelu_erf(h + b1_ref[...].astype(jnp.float32))
    out = jnp.dot(h.astype(compute_dtype), w2_ref[...],
                  preferred_element_type=jnp.float32)
    z = y + out + b2_ref[...].astype(jnp.float32)      # residual 2
    o_ref[...] = z.astype(o_ref.dtype)


# ---------------------------------------------------------------------------
# Wrapper
# ---------------------------------------------------------------------------
def block_forward(x, params, *, num_heads, tm=256, compute_dtype=None):
    """Forward of `Block` (drop=0, drop_path=0, no rel_pos_bias / attn_mask).

    x: [B, N, C].  params: ln1_g/b [C], qkv_w [C,3C], qkv_b [3C] or None,
    proj_w [C,C], proj_b [C], ln2_g/b [C], fc1_w [C,H], fc1_b [H],
    fc2_w [H,C], fc2_b [C].  Returns (y [B,N,C], attn_wo_softmax [B,heads,N,N]).
    """
    B, N, C = x.shape
    assert C % num_heads == 0
    hd = C // num_heads
    scale = hd ** (-0.5)
    cdt = compute_dtype if compute_dtype is not None else x.dtype

    M = B * N
    tm_eff = min(int(tm), _round_up(M, 8))      # big token tile, but no over-pad on tiny inputs
    Mpad = _round_up(M, tm_eff)
    n_tiles = Mpad // tm_eff

    x2d = x.reshape(M, C)
    xp = jnp.pad(x2d, ((0, Mpad - M), (0, 0))) if Mpad > M else x2d

    ln1_g = params["ln1_g"].reshape(1, C)
    ln1_b = params["ln1_b"].reshape(1, C)
    qkv_w = params["qkv_w"].astype(cdt)
    qkv_b = (params["qkv_b"] if params.get("qkv_b") is not None
             else jnp.zeros((3 * C,), x.dtype)).reshape(1, 3 * C)
    proj_w = params["proj_w"].astype(cdt)
    proj_b = params["proj_b"].reshape(1, C)
    ln2_g = params["ln2_g"].reshape(1, C)
    ln2_b = params["ln2_b"].reshape(1, C)
    fc1_w = params["fc1_w"].astype(cdt)
    fc1_b = params["fc1_b"].reshape(1, -1)
    fc2_w = params["fc2_w"].astype(cdt)
    fc2_b = params["fc2_b"].reshape(1, C)
    H = fc1_w.shape[1]

    # -------- Kernel A: LN1 + QKV --------
    qkv_all = pl.pallas_call(
        partial(_ln_qkv_kernel, compute_dtype=cdt),
        out_shape=jax.ShapeDtypeStruct((Mpad, 3 * C), x.dtype),
        grid_spec=pltpu.PrefetchScalarGridSpec(
            num_scalar_prefetch=0,
            grid=(n_tiles,),
            in_specs=[
                pl.BlockSpec((tm_eff, C), lambda i: (i, 0)),
                pl.BlockSpec((1, C), lambda i: (0, 0)),
                pl.BlockSpec((1, C), lambda i: (0, 0)),
                pl.BlockSpec((C, 3 * C), lambda i: (0, 0)),
                pl.BlockSpec((1, 3 * C), lambda i: (0, 0)),
            ],
            out_specs=pl.BlockSpec((tm_eff, 3 * C), lambda i: (i, 0)),
        ),
        compiler_params=pltpu.CompilerParams(
            dimension_semantics=("parallel",),
            vmem_limit_bytes=_vmem_limit_bytes(
                tm_eff * C, C * 3 * C, 4 * C, tm_eff * 3 * C)),
    )(xp, ln1_g, ln1_b, qkv_w, qkv_b)

    # -------- head split (layout plumbing in JAX) --------
    qkv = qkv_all[:M].reshape(B, N, 3, num_heads, hd).transpose(2, 0, 3, 1, 4)
    q = qkv[0].reshape(B * num_heads, N, hd)
    k = qkv[1].reshape(B * num_heads, N, hd)
    v = qkv[2].reshape(B * num_heads, N, hd)

    # -------- Kernel B: attention core per (batch, head) --------
    attn_out, attn_logits = pl.pallas_call(
        partial(_attention_kernel, scale=scale, compute_dtype=cdt),
        out_shape=(
            jax.ShapeDtypeStruct((B * num_heads, N, hd), x.dtype),
            jax.ShapeDtypeStruct((B * num_heads, N, N), jnp.float32),
        ),
        grid_spec=pltpu.PrefetchScalarGridSpec(
            num_scalar_prefetch=0,
            grid=(B * num_heads,),
            in_specs=[
                pl.BlockSpec((1, N, hd), lambda i: (i, 0, 0)),
                pl.BlockSpec((1, N, hd), lambda i: (i, 0, 0)),
                pl.BlockSpec((1, N, hd), lambda i: (i, 0, 0)),
            ],
            out_specs=[
                pl.BlockSpec((1, N, hd), lambda i: (i, 0, 0)),
                pl.BlockSpec((1, N, N), lambda i: (i, 0, 0)),
            ],
        ),
        compiler_params=pltpu.CompilerParams(
            dimension_semantics=("parallel",)),
    )(q, k, v)

    # -------- concat heads, pad tokens --------
    ao = attn_out.reshape(B, num_heads, N, hd).transpose(0, 2, 1, 3).reshape(M, C)
    aop = jnp.pad(ao, ((0, Mpad - M), (0, 0))) if Mpad > M else ao

    # -------- Kernel C: proj + residual + LN2 + MLP + residual --------
    z = pl.pallas_call(
        partial(_proj_mlp_kernel, compute_dtype=cdt),
        out_shape=jax.ShapeDtypeStruct((Mpad, C), x.dtype),
        grid_spec=pltpu.PrefetchScalarGridSpec(
            num_scalar_prefetch=0,
            grid=(n_tiles,),
            in_specs=[
                pl.BlockSpec((tm_eff, C), lambda i: (i, 0)),   # x (residual)
                pl.BlockSpec((tm_eff, C), lambda i: (i, 0)),   # attn out (heads concat)
                pl.BlockSpec((C, C), lambda i: (0, 0)),        # proj_w
                pl.BlockSpec((1, C), lambda i: (0, 0)),        # proj_b
                pl.BlockSpec((1, C), lambda i: (0, 0)),        # ln2_g
                pl.BlockSpec((1, C), lambda i: (0, 0)),        # ln2_b
                pl.BlockSpec((C, H), lambda i: (0, 0)),        # fc1_w
                pl.BlockSpec((1, H), lambda i: (0, 0)),        # fc1_b
                pl.BlockSpec((H, C), lambda i: (0, 0)),        # fc2_w
                pl.BlockSpec((1, C), lambda i: (0, 0)),        # fc2_b
            ],
            out_specs=pl.BlockSpec((tm_eff, C), lambda i: (i, 0)),
        ),
        compiler_params=pltpu.CompilerParams(
            dimension_semantics=("parallel",),
            vmem_limit_bytes=_vmem_limit_bytes(
                2 * tm_eff * C, C * C + C * H + H * C + 4 * C + H,
                tm_eff * H, tm_eff * C)),
    )(xp, aop, proj_w, proj_b, ln2_g, ln2_b, fc1_w, fc1_b, fc2_w, fc2_b)

    y = z[:M].reshape(B, N, C)
    attn_wo_softmax = attn_logits.reshape(B, num_heads, N, N)
    return y, attn_wo_softmax


# ---------------------------------------------------------------------------
# Pure-JAX reference (mirrors the PyTorch Block forward)
# ---------------------------------------------------------------------------
def block_reference(x, params, *, num_heads):
    B, N, C = x.shape
    hd = C // num_heads
    scale = hd ** (-0.5)

    def ln(t, g, b):
        mu = t.mean(-1, keepdims=True)
        var = ((t - mu) ** 2).mean(-1, keepdims=True)
        return (t - mu) / jnp.sqrt(var + _LN_EPS) * g + b

    qkv_b = params["qkv_b"] if params.get("qkv_b") is not None else 0.0
    xn = ln(x, params["ln1_g"], params["ln1_b"])
    qkv = xn @ params["qkv_w"] + qkv_b
    qkv = qkv.reshape(B, N, 3, num_heads, hd).transpose(2, 0, 3, 1, 4)
    q, k, v = qkv[0], qkv[1], qkv[2]
    attn_logits = jnp.einsum("bhqd,bhkd->bhqk", q * scale, k)
    attn = jax.nn.softmax(attn_logits, axis=-1)
    ao = jnp.einsum("bhqk,bhkd->bhqd", attn, v)
    ao = ao.transpose(0, 2, 1, 3).reshape(B, N, C)
    y = x + (ao @ params["proj_w"] + params["proj_b"])
    yn = ln(y, params["ln2_g"], params["ln2_b"])
    h = yn @ params["fc1_w"] + params["fc1_b"]
    h = 0.5 * h * (1.0 + lax.erf(h / jnp.sqrt(2.0)))
    z = y + (h @ params["fc2_w"] + params["fc2_b"])
    return z, attn_logits


if __name__ == "__main__":
    # Small shapes consistent with the module: batch=2, seq=8, dim=32, heads=4,
    # mlp_ratio=4 -> hidden=128, qkv_bias=False, drop=drop_path=0.
    B, N, dim, heads = 2, 8, 32, 4
    hidden = int(dim * 4.0)

    key = jax.random.PRNGKey(0)
    ks = jax.random.split(key, 12)
    x = jax.random.normal(ks[0], (B, N, dim), dtype=jnp.float32)
    params = dict(
        ln1_g=jnp.ones((dim,), jnp.float32) + 0.02 * jax.random.normal(ks[1], (dim,)),
        ln1_b=0.02 * jax.random.normal(ks[2], (dim,)),
        qkv_w=0.05 * jax.random.normal(ks[3], (dim, 3 * dim)),
        qkv_b=None,  # qkv_bias=False (module default)
        proj_w=0.05 * jax.random.normal(ks[4], (dim, dim)),
        proj_b=0.02 * jax.random.normal(ks[5], (dim,)),
        ln2_g=jnp.ones((dim,), jnp.float32) + 0.02 * jax.random.normal(ks[6], (dim,)),
        ln2_b=0.02 * jax.random.normal(ks[7], (dim,)),
        fc1_w=0.05 * jax.random.normal(ks[8], (dim, hidden)),
        fc1_b=0.02 * jax.random.normal(ks[9], (hidden,)),
        fc2_w=0.05 * jax.random.normal(ks[10], (hidden, dim)),
        fc2_b=0.02 * jax.random.normal(ks[11], (dim,)),
    )

    # f32 path (exact semantics of the torch module)
    y, attn = block_forward(x, params, num_heads=heads, tm=256)
    y = jax.block_until_ready(y)
    attn = jax.block_until_ready(attn)

    y_ref, attn_ref = block_reference(x, params, num_heads=heads)
    assert y.shape == (B, N, dim) and attn.shape == (B, heads, N, N)
    assert jnp.allclose(y, y_ref, atol=1e-4, rtol=1e-4), \
        float(jnp.max(jnp.abs(y - y_ref)))
    assert jnp.allclose(attn, attn_ref, atol=1e-4, rtol=1e-4)

    # bf16 MXU operands with f32 accumulation (performance configuration)
    y16, _ = block_forward(x, params, num_heads=heads, tm=256,
                           compute_dtype=jnp.bfloat16)
    y16 = jax.block_until_ready(y16)
    assert jnp.allclose(y16, y_ref, atol=1e-1, rtol=1e-1)

    print("KERNEL_OK")
</pallas_src>

<mosaic_0001>
module attributes {stable_mosaic.version = 11 : i64} {
  func.func @_ln_qkv_kernel(%arg0: i32, %arg1: memref<16x32xf32, #tpu.memory_space<vmem>>, %arg2: memref<1x32xf32, #tpu.memory_space<vmem>>, %arg3: memref<1x32xf32, #tpu.memory_space<vmem>>, %arg4: memref<32x96xf32, #tpu.memory_space<vmem>>, %arg5: memref<1x96xf32, #tpu.memory_space<vmem>>, %arg6: memref<16x96xf32, #tpu.memory_space<vmem>>) attributes {dimension_semantics = [#tpu.dimension_semantics<parallel>], iteration_bounds = array<i64: 1>, scalar_prefetch = 0 : i64, scratch_operands = 0 : i64, tpu.core_type = #tpu.core_type<tc>, window_params = [{transform_indices = @transform_0, window_bounds = array<i64: 16, 32>}, {pipeline_mode = #tpu.pipeline_mode<synchronous>, transform_indices = @transform_1, window_bounds = array<i64: 1, 32>}, {pipeline_mode = #tpu.pipeline_mode<synchronous>, transform_indices = @transform_2, window_bounds = array<i64: 1, 32>}, {pipeline_mode = #tpu.pipeline_mode<synchronous>, transform_indices = @transform_3, window_bounds = array<i64: 32, 96>}, {pipeline_mode = #tpu.pipeline_mode<synchronous>, transform_indices = @transform_4, window_bounds = array<i64: 1, 96>}, {transform_indices = @transform_5, window_bounds = array<i64: 16, 96>}]} {
    %c0 = arith.constant 0 : index
    %c0_0 = arith.constant 0 : index
    %0 = vector.load %arg1[%c0, %c0_0] : memref<16x32xf32, #tpu.memory_space<vmem>>, vector<16x32xf32>
    %c0_1 = arith.constant 0 : index
    %c0_2 = arith.constant 0 : index
    %1 = vector.load %arg2[%c0_1, %c0_2] : memref<1x32xf32, #tpu.memory_space<vmem>>, vector<1x32xf32>
    %c0_3 = arith.constant 0 : index
    %c0_4 = arith.constant 0 : index
    %2 = vector.load %arg3[%c0_3, %c0_4] : memref<1x32xf32, #tpu.memory_space<vmem>>, vector<1x32xf32>
    %cst = arith.constant dense<0.000000e+00> : vector<16xf32>
    %3 = vector.multi_reduction <add>, %0, %cst [1] : vector<16x32xf32> to vector<16xf32>
    %4 = vector.shape_cast %3 : vector<16xf32> to vector<16x1xf32>
    %cst_5 = arith.constant 3.200000e+01 : f32
    %5 = vector.broadcast %cst_5 : f32 to vector<16x1xf32>
    %6 = arith.divf %4, %5 : vector<16x1xf32>
    %7 = vector.broadcast %6 : vector<16x1xf32> to vector<16x32xf32>
    %8 = arith.subf %0, %7 : vector<16x32xf32>
    %9 = arith.mulf %8, %8 : vector<16x32xf32>
    %cst_6 = arith.constant dense<0.000000e+00> : vector<16xf32>
    %10 = vector.multi_reduction <add>, %9, %cst_6 [1] : vector<16x32xf32> to vector<16xf32>
    %11 = vector.shape_cast %10 : vector<16xf32> to vector<16x1xf32>
    %cst_7 = arith.constant 3.200000e+01 : f32
    %12 = vector.broadcast %cst_7 : f32 to vector<16x1xf32>
    %13 = arith.divf %11, %12 : vector<16x1xf32>
    %cst_8 = arith.constant 9.99999974E-6 : f32
    %14 = vector.broadcast %cst_8 : f32 to vector<16x1xf32>
    %15 = arith.addf %13, %14 : vector<16x1xf32>
    %16 = math.rsqrt %15 : vector<16x1xf32>
    %17 = vector.broadcast %16 : vector<16x1xf32> to vector<16x32xf32>
    %18 = arith.mulf %8, %17 : vector<16x32xf32>
    %19 = vector.broadcast %1 : vector<1x32xf32> to vector<16x32xf32>
    %20 = arith.mulf %18, %19 : vector<16x32xf32>
    %21 = vector.broadcast %2 : vector<1x32xf32> to vector<16x32xf32>
    %22 = arith.addf %20, %21 : vector<16x32xf32>
    %c0_9 = arith.constant 0 : index
    %c0_10 = arith.constant 0 : index
    %23 = vector.load %arg4[%c0_9, %c0_10] : memref<32x96xf32, #tpu.memory_space<vmem>>, vector<32x96xf32>
    %cst_11 = arith.constant dense<0.000000e+00> : vector<16x96xf32>
    %24 = tpu.matmul %22, %23, %cst_11 {dimension_numbers = #tpu.dot_dimension_numbers<[1], [0], [0], [1], [0, 0, 1, 1], [], []>} : vector<16x32xf32>, vector<32x96xf32>, vector<16x96xf32> -> vector<16x96xf32>
    %c0_12 = arith.constant 0 : index
    %c0_13 = arith.constant 0 : index
    %25 = vector.load %arg5[%c0_12, %c0_13] : memref<1x96xf32, #tpu.memory_space<vmem>>, vector<1x96xf32>
    %26 = vector.broadcast %25 : vector<1x96xf32> to vector<16x96xf32>
    %27 = arith.addf %24, %26 : vector<16x96xf32>
    %c0_14 = arith.constant 0 : index
    %c0_15 = arith.constant 0 : index
    %28 = vector.load %arg6[%c0_14, %c0_15] : memref<16x96xf32, #tpu.memory_space<vmem>>, vector<16x96xf32>
    tpu.vector_store %arg6[%c0_14, %c0_15], %27 {strides = array<i32>} : memref<16x96xf32, #tpu.memory_space<vmem>>, vector<16x96xf32>,
    return
  }
  func.func @transform_0(%arg0: i32) -> (i32, i32) {
    %c0_i32 = arith.constant 0 : i32
    %c0_i32_0 = arith.constant 0 : i32
    return %arg0, %c0_i32 : i32, i32
  }
  func.func @transform_1(%arg0: i32) -> (i32, i32) {
    %c0_i32 = arith.constant 0 : i32
    %c0_i32_0 = arith.constant 0 : i32
    %c0_i32_1 = arith.constant 0 : i32
    return %c0_i32, %c0_i32_0 : i32, i32
  }
  func.func @transform_2(%arg0: i32) -> (i32, i32) {
    %c0_i32 = arith.constant 0 : i32
    %c0_i32_0 = arith.constant 0 : i32
    %c0_i32_1 = arith.constant 0 : i32
    return %c0_i32, %c0_i32_0 : i32, i32
  }
  func.func @transform_3(%arg0: i32) -> (i32, i32) {
    %c0_i32 = arith.constant 0 : i32
    %c0_i32_0 = arith.constant 0 : i32
    %c0_i32_1 = arith.constant 0 : i32
    return %c0_i32, %c0_i32_0 : i32, i32
  }
  func.func @transform_4(%arg0: i32) -> (i32, i32) {
    %c0_i32 = arith.constant 0 : i32
    %c0_i32_0 = arith.constant 0 : i32
    %c0_i32_1 = arith.constant 0 : i32
    return %c0_i32, %c0_i32_0 : i32, i32
  }
  func.func @transform_5(%arg0: i32) -> (i32, i32) {
    %c0_i32 = arith.constant 0 : i32
    %c0_i32_0 = arith.constant 0 : i32
    return %arg0, %c0_i32 : i32, i32
  }
}

</mosaic_0001>

<llo_original>
// kernel: tpu_custom_call.1
$region0: #{tpu_custom_call.1}
  #allocation0 [shape = 'u32[]', space=smem, size = 0x4, offset = 0x4, fixed_abs, tag = 'smem constant byte address 0x4 - core index']
  #allocation1 [shape = 'u32[144,128]{1,0:T(1,128)}', space=vmem, size = 0x12000, scoped, tag = 'internal scratch']
  %s0 = inlined_call_operand.hbm [shape: f32[16,32], index: 0, kind: input, shape index: {}]
  %s1 = inlined_call_operand.vmem [shape: f32[1,32], index: 1, kind: input, shape index: {}]
  %s2 = inlined_call_operand.vmem [shape: f32[1,32], index: 2, kind: input, shape index: {}]
  %s3 = inlined_call_operand.hbm [shape: f32[32,96], index: 3, kind: input, shape index: {}]
  %s4 = inlined_call_operand.vmem [shape: f32[1,96], index: 4, kind: input, shape index: {}]
  %s5 = inlined_call_operand.hbm [shape: f32[16,96], index: 5, kind: output, shape index: {}]
  %s6 = sld [smem:[#allocation0]]
  $region38: #{tpu_custom_call.1} parent=0
    _
  %s8 = ssub.s32 1, %s6
  %s9 = scalar_select 0, %s8, %s6
  $region1: #{tpu_custom_call.1} parent=0
    #allocation2 [shape = 'u8[8192]{0}', space=vmem, size = 0x2000, scoped, tag = 'input window, operand 0, single buffered']
    #allocation3 [shape = 's32[1]{0}', space=sflag, size = 0x4, scoped, tag = 'scoped memory for tpu_custom_call.1']
    #allocation4 [shape = 's32[1]{0}', space=sflag, size = 0x4, scoped, tag = 'scoped memory for tpu_custom_call.1']
    #allocation5 [shape = 'u8[16384]{0}', space=vmem, size = 0x4000, scoped, tag = 'input window, operand 3, single buffered']
    #allocation6 [shape = 's32[1]{0}', space=sflag, size = 0x4, scoped, tag = 'scoped memory for tpu_custom_call.1']
    #allocation7 [shape = 'u8[8192]{0}', space=vmem, size = 0x2000, scoped, tag = 'output window, operand 0, single buffered']
    %10 = vsyncpa [#allocation3], 0
    %11 = vsyncpa [#allocation6], 0
    %12 = vsyncpa [#allocation4], 0
    // Predicated region
    $region2: #{tpu_custom_call.1} parent=1 // pred_check
      _
    $region3: #{tpu_custom_call.1} parent=1 // pred_check_branch
      %14 = sbr.rel (0) target = $region5
    $region4: #{tpu_custom_call.1} parent=1 // pred_region
      %s16 = ssub.s32 256, 256
      %17 = vsyncadd [#allocation3], %s16
      %s18 = sshll.u32 [#allocation2], 4
      %s19 = int_to_ptr.vmem [resolvable:$true] %s18
      %24 = dma.hbm_to_vmem [thread:$0]  %s0, 256, %s19, [#allocation3], 128, 128, 8
    $region5: #{tpu_custom_call.1} parent=1 // pred_fallthru
      _
    // Predicated region
    $region6: #{tpu_custom_call.1} parent=1 // pred_check
      _
    $region7: #{tpu_custom_call.1} parent=1 // pred_check_branch
      %26 = sbr.rel (0) target = $region9
    $region8: #{tpu_custom_call.1} parent=1 // pred_region
      _
    $region9: #{tpu_custom_call.1} parent=1 // pred_fallthru
      _
    // Predicated region
    $region10: #{tpu_custom_call.1} parent=1 // pred_check
      _
    $region11: #{tpu_custom_call.1} parent=1 // pred_check_branch
      %28 = sbr.rel (0) target = $region13
    $region12: #{tpu_custom_call.1} parent=1 // pred_region
      _
    $region13: #{tpu_custom_call.1} parent=1 // pred_fallthru
      _
    // Predicated region
    $region14: #{tpu_custom_call.1} parent=1 // pred_check
      _
    $region15: #{tpu_custom_call.1} parent=1 // pred_check_branch
      %30 = sbr.rel (0) target = $region17
    $region16: #{tpu_custom_call.1} parent=1 // pred_region
      %s32 = ssub.s32 512, 512
      %33 = vsyncadd [#allocation6], %s32
      %s34 = sshll.u32 [#allocation5], 4
      %s35 = int_to_ptr.vmem [resolvable:$true] %s34
      %40 = dma.hbm_to_vmem [thread:$0]  %s3, 512, %s35, [#allocation6], 128, 128, 8
    $region17: #{tpu_custom_call.1} parent=1 // pred_fallthru
      _
    // Predicated region
    $region18: #{tpu_custom_call.1} parent=1 // pred_check
      _
    $region19: #{tpu_custom_call.1} parent=1 // pred_check_branch
      %42 = sbr.rel (0) target = $region21
    $region20: #{tpu_custom_call.1} parent=1 // pred_region
      _
    $region21: #{tpu_custom_call.1} parent=1 // pred_fallthru
      _
    // Predicated region
    $region22: #{tpu_custom_call.1} parent=1 // pred_check
      _
    $region23: #{tpu_custom_call.1} parent=1 // pred_check_branch
      %44 = sbr.rel (0) target = $region25
    $region24: #{tpu_custom_call.1} parent=1 // pred_region
      %45 = dma.done [#allocation3], 256
    $region25: #{tpu_custom_call.1} parent=1 // pred_fallthru
      _
    // Predicated region
    $region26: #{tpu_custom_call.1} parent=1 // pred_check
      _
    $region27: #{tpu_custom_call.1} parent=1 // pred_check_branch
      %47 = sbr.rel (0) target = $region29
    $region28: #{tpu_custom_call.1} parent=1 // pred_region
      %48 = dma.done [#allocation6], 512
    $region29: #{tpu_custom_call.1} parent=1 // pred_fallthru
      _
    %v49 = vld [vmem:[#allocation2] sm:$0xff]
    %v50 = vld [vmem:[#allocation2 + $0x8] sm:$0xff]
    %v51 = vld [vmem:[%s1] sm:$0x1]
    %v52 = vld [vmem:[%s2] sm:$0x1]
    %vm53 = vcmask 261120
    %v54 = vsel %vm53, %v49, 0.0
    %55 = vadd.xlane.f32.xlu0 %v54
    %v56 = vpop.xlane.xlu0 %55
    %v57 = vsel %vm53, %v50, 0.0
    %58 = vadd.xlane.f32.xlu0 %v57
    %v59 = vpop.xlane.xlu0 %58
    %v60 = vrcp.pop 32.0
    %v61 = vmul.f32 %v56, %v60
    %v62 = vmul.f32 %v59, %v60
    %v63 = vsub.f32 %v49, %v61
    %v64 = vsub.f32 %v50, %v62
    %v65 = vmul.f32 %v63, %v63
    %v66 = vmul.f32 %v64, %v64
    %v67 = vsel %vm53, %v65, 0.0
    %68 = vadd.xlane.f32.xlu0 %v67
    %v69 = vpop.xlane.xlu0 %68
    %v70 = vsel %vm53, %v66, 0.0
    %71 = vadd.xlane.f32.xlu0 %v70
    %v72 = vpop.xlane.xlu0 %71
    %v73 = vmul.f32 %v69, %v60
    %v74 = vmul.f32 %v72, %v60
    %v75 = vadd.f32 %v73, 1e-05
    %v76 = vadd.f32 %v74, 1e-05
    %v77 = vrsqrt.pop %v75
    %v78 = vrsqrt.pop %v76
    %v79 = vmul.f32 %v63, %v77
    %v80 = vmul.f32 %v64, %v78
    %v82 = vlaneseq
    %v83 = vshrl.u32 %v82, 7
    %v84 = vsub.s32 0, %v83
    %v85 = vrot.slane %v51, %v84
    %v87 = vmul.f32 %v79, %v85
    %v88 = vmul.f32 %v80, %v85
    %v90 = vlaneseq
    %v91 = vshrl.u32 %v90, 7
    %v92 = vsub.s32 0, %v91
    %v93 = vrot.slane %v52, %v92
    %v95 = vadd.f32 %v87, %v93
    %v96 = vadd.f32 %v88, %v93
    %v97 = vld [vmem:[#allocation5] sm:$0xff]
    %v98 = vld [vmem:[#allocation5 + $0x8] sm:$0xff]
    %v99 = vld [vmem:[#allocation5 + $0x10] sm:$0xff]
    %v100 = vld [vmem:[#allocation5 + $0x18] sm:$0xff]
    %v101 = vld [vmem:[%s4] sm:$0x1]
    %v103 = vlaneseq
    %v104 = vshrl.u32 %v103, 7
    %v105 = vsub.s32 0, %v104
    %v106 = vrot.slane %v101, %v105
    %v109 = vsel %vm53, %v95, 0
    %v112 = vsel %vm53, %v96, 0
    %114 = vmatprep.subr.mxu0 0.0
    %115 = vmatpush1.msra.mxu0 %v97
    %116 = vmatprep.subr.mxu0 0.0
    %117 = vmatpush1.msra.mxu0 %v98
    %118 = vmatprep.subr.mxu0 0.0
    %119 = vmatpush1.msra.mxu0 %v99
    %120 = vmatprep.subr.mxu0 0.0
    %121 = vmatpush1.msra.mxu0 %v100
    %122 = vmatprep.subr.mxu0 0.0
    %123 = vmatpush1.msra.mxu0 0.0
    %124 = vmatprep.subr.mxu0 0.0
    %125 = vmatpush1.msra.mxu0 0.0
    %126 = vmatprep.subr.mxu0 0.0
    %127 = vmatpush1.msra.mxu0 0.0
    %128 = vmatprep.subr.mxu0 0.0
    %129 = vmatpush1.msra.mxu0 0.0
    %130 = vmatprep.subr.mxu0 0.0
    %131 = vmatpush1.msra.mxu0 0.0
    %132 = vmatprep.subr.mxu0 0.0
    %133 = vmatpush1.msra.mxu0 0.0
    %134 = vmatprep.subr.mxu0 0.0
    %135 = vmatpush1.msra.mxu0 0.0
    %136 = vmatprep.subr.mxu0 0.0
    %137 = vmatpush1.msra.mxu0 0.0
    %138 = vmatprep.subr.mxu0 0.0
    %139 = vmatpush1.msra.mxu0 0.0
    %140 = vmatprep.subr.mxu0 0.0
    %141 = vmatpush1.msra.mxu0 0.0
    %142 = vmatprep.subr.mxu0 0.0
    %143 = vmatpush1.msra.mxu0 0.0
    %144 = vmatprep.subr.mxu0 0.0
    %145 = vmatpush1.msra.mxu0 0.0
    %146 = vmatprep.subr.mxu0 0.0
    %147 = vmatpush1.msra.mxu0 0.0
    %148 = vmatprep.subr.mxu0 0.0
    %149 = vmatpush1.msra.mxu0 0.0
    %150 = vmatprep.subr.mxu0 0.0
    %151 = vmatpush1.msra.mxu0 0.0
    %152 = vmatprep.subr.mxu0 0.0
    %153 = vmatpush1.msra.mxu0 0.0
    %154 = vmatprep.subr.mxu0 0.0
    %155 = vmatpush1.msra.mxu0 0.0
    %156 = vmatprep.subr.mxu0 0.0
    %157 = vmatpush1.msra.mxu0 0.0
    %158 = vmatprep.subr.mxu0 0.0
    %159 = vmatpush1.msra.mxu0 0.0
    %160 = vmatprep.subr.mxu0 0.0
    %161 = vmatpush1.msra.mxu0 0.0
    %162 = vmatprep.subr.mxu0 0.0
    %163 = vmatpush1.msra.mxu0 0.0
    %164 = vmatprep.subr.mxu0 0.0
    %165 = vmatpush1.msra.mxu0 0.0
    %166 = vmatprep.subr.mxu0 0.0
    %167 = vmatpush1.msra.mxu0 0.0
    %168 = vmatprep.subr.mxu0 0.0
    %169 = vmatpush1.msra.mxu0 0.0
    %170 = vmatprep.subr.mxu0 0.0
    %171 = vmatpush1.msra.mxu0 0.0
    %172 = vmatprep.subr.mxu0 0.0
    %173 = vmatpush1.msra.mxu0 0.0
    %174 = vmatprep.subr.mxu0 0.0
    %175 = vmatpush1.msra.mxu0 0.0
    %176 = vmatprep.subr.mxu0 0.0
    %177 = vmatpush1.msra.mxu0 0.0
    %178 = vmatprep.mubr.f32.mxu0 0.0
    %179 = vmatmul.mubr.f32.gmra.mrb[0].mxu0 %v109
    %v180 = vpop.f32.mrb[0].mxu0
    %v181 = vadd.f32 %v106, %v180
    %v182 = vpop.f32.mrb[0].mxu0
    %183 = vmatprep.mubr.f32.mxu0 0.0
    %184 = vmatmul.mubr.f32.gmra.mrb[0].mxu0 %v112
    %v185 = vpop.f32.mrb[0].mxu0
    %v186 = vadd.f32 %v106, %v185
    %v187 = vpop.f32.mrb[0].mxu0
    %188 = vdwg.mxu0
    %vm189 = vcmask 785408
    %190 = vst.msk [vmem:[#allocation7] sm:$0xff] %vm189, %v181
    %191 = vst.msk [vmem:[#allocation7 + $0x8] sm:$0xff] %vm189, %v186
    // Predicated region
    $region30: #{tpu_custom_call.1} parent=1 // pred_check
      _
    $region31: #{tpu_custom_call.1} parent=1 // pred_check_branch
      %193 = sbr.rel (0) target = $region33
    $region32: #{tpu_custom_call.1} parent=1 // pred_region
      %s195 = ssub.s32 256, 256
      %196 = vsyncadd [#allocation4], %s195
      %s197 = sshll.u32 [#allocation7], 4
      %s198 = int_to_ptr.vmem [resolvable:$true] %s197
      %203 = dma.vmem_to_hbm [thread:$0]  %s198, 256, %s5, [#allocation4], 128, 128, 8
    $region33: #{tpu_custom_call.1} parent=1 // pred_fallthru
      _
    // Predicated region
    $region34: #{tpu_custom_call.1} parent=1 // pred_check
      _
    $region35: #{tpu_custom_call.1} parent=1 // pred_check_branch
      %205 = sbr.rel (0) target = $region37
    $region36: #{tpu_custom_call.1} parent=1 // pred_region
      %206 = dma.done [#allocation4], 256
    $region37: #{tpu_custom_call.1} parent=1 // pred_fallthru
      _
    %207 = vsyncpa [#allocation3], 1
    %208 = vsyncpa [#allocation6], 1
    %209 = vsyncpa [#allocation4], 1

</llo_original>
